<compile_context>
chip_gen: v7x
topology: tpu7x:2x2x1
jax: 0.10.0
libtpu: 0.0.40
codegen_flags: <defaults>
</compile_context>

<pallas_src>
import jax
import jax.numpy as jnp
import numpy as np
from jax.experimental import pallas as pl
from jax.experimental.pallas import tpu as pltpu

# ---- DiceLoss "module" configuration (mirrors nn.Module.__init__ args) ----
CLASSES = 2
DIMENSION = 2
MASK_LABELS_NUMERIC = {"background": 0, "organ": 1}
MASK_CLASS_WEIGHTS = {"background": 1.0, "organ": 2.0}
IS_METRIC = False
EPS = 1e-10
TOT_WEIGHT = float(sum(MASK_CLASS_WEIGHTS.values()))

# Conservative per-step VMEM budget for the "no spatial reduction axis" path
# (v5e scoped default is 16 MiB; v7x per-TC VMEM is 64 MiB physical).
_FULL_IMAGE_VMEM_BUDGET = 12 * 1024 * 1024


def _class_weight(c):
    """Traced per-row class weight (compile-time constants, runtime select)."""
    w = jnp.float32(0.0)
    for name, cls_idx in MASK_LABELS_NUMERIC.items():
        w = jnp.where(c == cls_idx, jnp.float32(MASK_CLASS_WEIGHTS[name]), w)
    return w


def _make_full_image_kernel(C, rows_per_shard, inv_norm):
    """One (b, c) row per grid step; full-image blocks; no scratch."""

    def kernel(p_ref, t_ref, o_ref):
        j = pl.program_id(1)

        @pl.when(j == 0)
        def _init():
            o_ref[...] = jnp.zeros_like(o_ref)

        p = p_ref[0].astype(jnp.float32)          # (H, W)
        t = t_ref[0].astype(jnp.float32)          # (H, W)

        # PyTorch forward does target.transpose(2, 3); fuse it here (XLU).
        # Union is transpose-invariant, so only the intersection needs it.
        pt = p * jnp.transpose(t)
        inter = jnp.sum(jnp.sum(pt, axis=1, keepdims=True),
                        axis=0, keepdims=True)                       # (1, 1)
        union = (jnp.sum(jnp.sum(p, axis=1, keepdims=True), axis=0, keepdims=True)
                 + jnp.sum(jnp.sum(t, axis=1, keepdims=True), axis=0, keepdims=True))
        dice = (2.0 * inter + EPS) / (union + EPS)                   # (1, 1)

        r = pl.program_id(0) * rows_per_shard + j   # global row = b*C + c
        w = _class_weight(r % C)
        contrib = (dice * (w * jnp.float32(inv_norm))).reshape(1, 1, 1)
        o_ref[...] += contrib                       # per-core-shard partial sum

    return kernel


def _make_ktiled_kernel(C, num_k, inv_norm):
    """Fallback for very large images: spatial reduction axis + VMEM partials."""

    def kernel(p_ref, t_ref, o_ref, acc_pt_ref, acc_u_ref):
        r = pl.program_id(0)
        k = pl.program_id(1)

        @pl.when(jnp.logical_and(r == 0, k == 0))
        def _init_out():
            o_ref[...] = jnp.zeros_like(o_ref)

        @pl.when(k == 0)
        def _init_acc():
            acc_pt_ref[...] = jnp.zeros_like(acc_pt_ref)
            acc_u_ref[...] = jnp.zeros_like(acc_u_ref)

        # pred tile  : image rows    [k*TH, (k+1)*TH)  -> (TH, W)
        # target tile: image columns [k*TH, (k+1)*TH)  -> (H, TH), transposed
        p = p_ref[0].astype(jnp.float32)                     # (TH, W)
        t = jnp.transpose(t_ref[0].astype(jnp.float32))      # (TH, W)
        acc_pt_ref[...] += p * t
        acc_u_ref[...] += p + t

        @pl.when(k == num_k - 1)
        def _finalize():
            inter = jnp.sum(jnp.sum(acc_pt_ref[...], axis=1, keepdims=True),
                            axis=0, keepdims=True)            # (1, 1)
            union = jnp.sum(jnp.sum(acc_u_ref[...], axis=1, keepdims=True),
                            axis=0, keepdims=True)            # (1, 1)
            dice = (2.0 * inter + EPS) / (union + EPS)
            w = _class_weight(r % C)
            o_ref[...] += (dice * (w * jnp.float32(inv_norm))).reshape(1, 1, 1)

    return kernel


@jax.jit
def dice_loss(pred, target):
    """Equivalent of DiceLoss(is_metric=False).forward(pred, target, task)."""
    B, C, H, W = pred.shape
    assert C == CLASSES
    # target.transpose(2, 3) in the reference implicitly requires H == W.
    assert H == W, "spatial dims must be square (target.transpose(2,3))"
    BC = B * C

    # Merge (B, C) -> rows.  No cast / transpose here (fused into the kernel).
    p3 = pred.reshape(BC, H, W)
    t3 = target.reshape(BC, H, W)

    inv_norm = 1.0 / (TOT_WEIGHT * B)   # folds the batch mean + tot_weight

    # Per-step VMEM estimate for the full-image path: double-buffered input
    # blocks (at input dtype) + ~3 f32-sized in-kernel temporaries.
    p_isz = jnp.dtype(pred.dtype).itemsize
    t_isz = jnp.dtype(target.dtype).itemsize
    full_bytes = (2 * (p_isz + t_isz) + 3 * 4) * H * W

    if full_bytes <= _FULL_IMAGE_VMEM_BUDGET:
        # ---- Primary path: no spatial reduction axis, contiguous DMAs. ----
        NC = 2 if BC % 2 == 0 else 1          # core shards (v7x megacore)
        rps = BC // NC                        # rows (grid steps) per shard
        kernel = _make_full_image_kernel(C, rps, inv_norm)
        out = pl.pallas_call(
            kernel,
            out_shape=jax.ShapeDtypeStruct((NC, 1, 1), jnp.float32),
            grid_spec=pltpu.PrefetchScalarGridSpec(
                num_scalar_prefetch=0,
                grid=(NC, rps),
                in_specs=[
                    pl.BlockSpec((1, H, W), lambda i, j: (i * rps + j, 0, 0)),
                    pl.BlockSpec((1, H, W), lambda i, j: (i * rps + j, 0, 0)),
                ],
                # Tiny per-core-shard accumulator output (disjoint per shard,
                # resident across the row axis).
                out_specs=pl.BlockSpec((1, 1, 1), lambda i, j: (i, 0, 0)),
            ),
            compiler_params=pltpu.CompilerParams(
                dimension_semantics=("parallel", "arbitrary")),
        )(p3, t3)
    else:
        # ---- Fallback for huge images: k-tiled spatial reduction. ----
        TH = 128 if H % 128 == 0 else H
        num_k = H // TH
        kernel = _make_ktiled_kernel(C, num_k, inv_norm)
        out = pl.pallas_call(
            kernel,
            out_shape=jax.ShapeDtypeStruct((1, 1, 1), jnp.float32),
            grid_spec=pltpu.PrefetchScalarGridSpec(
                num_scalar_prefetch=0,
                grid=(BC, num_k),
                in_specs=[
                    # pred: rows h in tile k           -> block (1, TH, W)
                    pl.BlockSpec((1, TH, W), lambda r, k: (r, k, 0)),
                    # target: columns h in tile k (transposed in-kernel);
                    # 3-deep buffering hides the slower strided DMA.
                    pl.BlockSpec((1, H, TH), lambda r, k: (r, 0, k),
                                 pipeline_mode=pl.Buffered(3)),
                ],
                out_specs=pl.BlockSpec((1, 1, 1), lambda r, k: (0, 0, 0)),
                scratch_shapes=[
                    pltpu.VMEM((TH, W), jnp.float32),   # intersection partials
                    pltpu.VMEM((TH, W), jnp.float32),   # union partials
                ],
            ),
            compiler_params=pltpu.CompilerParams(
                dimension_semantics=("arbitrary", "arbitrary")),
        )(p3, t3)

    # out holds per-shard sums of dice * class_weight / (tot_weight * B);
    # -mean_dice == -sum over the (at most 2) shard partials.
    return -jnp.sum(out)


def dice_loss_ref(pred, target):
    """Pure-JAX reference of the PyTorch non-metric path."""
    pred = pred.astype(jnp.float32)
    target_t = jnp.swapaxes(target.astype(jnp.float32), 2, 3)
    axes = tuple(range(2, DIMENSION + 2))
    inter = jnp.sum(pred * target_t, axis=axes)
    union = jnp.sum(pred, axis=axes) + jnp.sum(target_t, axis=axes)
    bg = (2.0 * inter[:, MASK_LABELS_NUMERIC["background"]] + EPS) / (
        union[:, MASK_LABELS_NUMERIC["background"]] + EPS)
    og = (2.0 * inter[:, MASK_LABELS_NUMERIC["organ"]] + EPS) / (
        union[:, MASK_LABELS_NUMERIC["organ"]] + EPS)
    mean_dice = jnp.mean(
        (bg * MASK_CLASS_WEIGHTS["background"] + og * MASK_CLASS_WEIGHTS["organ"])
        / TOT_WEIGHT, axis=0)
    return -mean_dice


if __name__ == "__main__":
    key = jax.random.PRNGKey(0)
    k1, k2 = jax.random.split(key)

    # Small segmentation-style shapes: batch=2, classes=2, 256x256 images
    # (2 rows per core shard -> exercises the init/accumulate/writeback path).
    B, C, H, W = 2, CLASSES, 256, 256
    logits = jax.random.normal(k1, (B, C, H, W), dtype=jnp.float32)
    pred = jax.nn.softmax(logits, axis=1)        # softmax over class dim, NCHW
    labels = jax.random.randint(k2, (B, H, W), 0, CLASSES)
    target = jnp.transpose(jax.nn.one_hot(labels, CLASSES, dtype=jnp.float32),
                           (0, 3, 1, 2))         # one-hot class mask, NCHW

    loss = dice_loss(pred, target)
    jax.block_until_ready(loss)

    ref = dice_loss_ref(pred, target)
    assert np.allclose(np.asarray(loss), np.asarray(ref), rtol=1e-4, atol=1e-6), (
        float(loss), float(ref))
    print("KERNEL_OK")
</pallas_src>

<mosaic_0001>
module attributes {stable_mosaic.version = 11 : i64} {
  func.func @kernel(%arg0: i32, %arg1: i32, %arg2: memref<1x256x256xf32, #tpu.memory_space<vmem>>, %arg3: memref<1x256x256xf32, #tpu.memory_space<vmem>>, %arg4: memref<1x1x1xf32, #tpu.memory_space<vmem>>) attributes {dimension_semantics = [#tpu.dimension_semantics<parallel>, #tpu.dimension_semantics<arbitrary>], iteration_bounds = array<i64: 2, 2>, scalar_prefetch = 0 : i64, scratch_operands = 0 : i64, tpu.core_type = #tpu.core_type<tc>, window_params = [{transform_indices = @transform_0, window_bounds = array<i64: 1, 256, 256>}, {transform_indices = @transform_1, window_bounds = array<i64: 1, 256, 256>}, {transform_indices = @transform_2, window_bounds = array<i64: 1, 1, 1>}]} {
    %c0_i32 = arith.constant 0 : i32
    %0 = arith.cmpi eq, %arg1, %c0_i32 : i32
    %1 = arith.extui %0 : i1 to i32
    %c0_i32_0 = arith.constant 0 : i32
    %2 = arith.cmpi ne, %1, %c0_i32_0 : i32
    scf.if %2 {
      %cst_31 = arith.constant 0.000000e+00 : f32
      %52 = vector.broadcast %cst_31 : f32 to vector<1x1x1xf32>
      %c0_32 = arith.constant 0 : index
      %c0_33 = arith.constant 0 : index
      %c0_34 = arith.constant 0 : index
      %53 = vector.load %arg4[%c0_32, %c0_33, %c0_34] : memref<1x1x1xf32, #tpu.memory_space<vmem>>, vector<1x1x1xf32>
      tpu.vector_store %arg4[%c0_32, %c0_33, %c0_34], %52 {strides = array<i32>} : memref<1x1x1xf32, #tpu.memory_space<vmem>>, vector<1x1x1xf32>,
    } else {
    }
    %c0 = arith.constant 0 : index
    %c0_1 = arith.constant 0 : index
    %c0_2 = arith.constant 0 : index
    %3 = vector.load %arg2[%c0, %c0_1, %c0_2] : memref<1x256x256xf32, #tpu.memory_space<vmem>>, vector<1x256x256xf32>
    %4 = vector.shape_cast %3 : vector<1x256x256xf32> to vector<256x256xf32>
    %c0_3 = arith.constant 0 : index
    %c0_4 = arith.constant 0 : index
    %c0_5 = arith.constant 0 : index
    %5 = vector.load %arg3[%c0_3, %c0_4, %c0_5] : memref<1x256x256xf32, #tpu.memory_space<vmem>>, vector<1x256x256xf32>
    %6 = vector.shape_cast %5 : vector<1x256x256xf32> to vector<256x256xf32>
    %7 = tpu.transpose %6, [1, 0] : vector<256x256xf32> -> vector<256x256xf32>
    %8 = arith.mulf %4, %7 : vector<256x256xf32>
    %cst = arith.constant dense<0.000000e+00> : vector<256xf32>
    %9 = vector.multi_reduction <add>, %8, %cst [1] : vector<256x256xf32> to vector<256xf32>
    %10 = vector.shape_cast %9 : vector<256xf32> to vector<256x1xf32>
    %cst_6 = arith.constant dense<0.000000e+00> : vector<1xf32>
    %11 = vector.multi_reduction <add>, %10, %cst_6 [0] : vector<256x1xf32> to vector<1xf32>
    %12 = vector.shape_cast %11 : vector<1xf32> to vector<1x1xf32>
    %cst_7 = arith.constant dense<0.000000e+00> : vector<256xf32>
    %13 = vector.multi_reduction <add>, %4, %cst_7 [1] : vector<256x256xf32> to vector<256xf32>
    %14 = vector.shape_cast %13 : vector<256xf32> to vector<256x1xf32>
    %cst_8 = arith.constant dense<0.000000e+00> : vector<1xf32>
    %15 = vector.multi_reduction <add>, %14, %cst_8 [0] : vector<256x1xf32> to vector<1xf32>
    %16 = vector.shape_cast %15 : vector<1xf32> to vector<1x1xf32>
    %cst_9 = arith.constant dense<0.000000e+00> : vector<256xf32>
    %17 = vector.multi_reduction <add>, %6, %cst_9 [1] : vector<256x256xf32> to vector<256xf32>
    %18 = vector.shape_cast %17 : vector<256xf32> to vector<256x1xf32>
    %cst_10 = arith.constant dense<0.000000e+00> : vector<1xf32>
    %19 = vector.multi_reduction <add>, %18, %cst_10 [0] : vector<256x1xf32> to vector<1xf32>
    %20 = vector.shape_cast %19 : vector<1xf32> to vector<1x1xf32>
    %21 = arith.addf %16, %20 : vector<1x1xf32>
    %cst_11 = arith.constant 2.000000e+00 : f32
    %22 = vector.broadcast %cst_11 : f32 to vector<1x1xf32>
    %23 = arith.mulf %22, %12 : vector<1x1xf32>
    %cst_12 = arith.constant 1.000000e-10 : f32
    %24 = vector.broadcast %cst_12 : f32 to vector<1x1xf32>
    %25 = arith.addf %23, %24 : vector<1x1xf32>
    %cst_13 = arith.constant 1.000000e-10 : f32
    %26 = vector.broadcast %cst_13 : f32 to vector<1x1xf32>
    %27 = arith.addf %21, %26 : vector<1x1xf32>
    %28 = arith.divf %25, %27 : vector<1x1xf32>
    %c2_i32 = arith.constant 2 : i32
    %29 = arith.muli %arg0, %c2_i32 : i32
    %30 = arith.addi %29, %arg1 : i32
    %c2_i32_14 = arith.constant 2 : i32
    %c0_i32_15 = arith.constant 0 : i32
    %31 = arith.cmpi eq, %c2_i32_14, %c0_i32_15 : i32
    %c1_i32 = arith.constant 1 : i32
    %32 = arith.select %31, %c1_i32, %c2_i32_14 : i32
    %33 = arith.remsi %30, %32 : i32
    %c0_i32_16 = arith.constant 0 : i32
    %34 = arith.cmpi ne, %33, %c0_i32_16 : i32
    %c0_i32_17 = arith.constant 0 : i32
    %35 = arith.cmpi slt, %33, %c0_i32_17 : i32
    %c0_i32_18 = arith.constant 0 : i32
    %36 = arith.cmpi slt, %32, %c0_i32_18 : i32
    %37 = arith.xori %35, %36 : i1
    %38 = arith.andi %37, %34 : i1
    %39 = arith.addi %33, %32 : i32
    %40 = arith.select %38, %39, %33 : i32
    %c0_i32_19 = arith.constant 0 : i32
    %41 = arith.cmpi eq, %40, %c0_i32_19 : i32
    %cst_20 = arith.constant 1.000000e+00 : f32
    %cst_21 = arith.constant 0.000000e+00 : f32
    %42 = arith.select %41, %cst_20, %cst_21 : f32
    %c1_i32_22 = arith.constant 1 : i32
    %43 = arith.cmpi eq, %40, %c1_i32_22 : i32
    %cst_23 = arith.constant 2.000000e+00 : f32
    %44 = arith.select %43, %cst_23, %42 : f32
    %cst_24 = arith.constant 0.166666672 : f32
    %45 = arith.mulf %44, %cst_24 : f32
    %46 = vector.broadcast %45 : f32 to vector<1x1xf32>
    %47 = arith.mulf %28, %46 : vector<1x1xf32>
    %48 = vector.shape_cast %47 : vector<1x1xf32> to vector<1x1x1xf32>
    %c0_25 = arith.constant 0 : index
    %c0_26 = arith.constant 0 : index
    %c0_27 = arith.constant 0 : index
    %49 = vector.load %arg4[%c0_25, %c0_26, %c0_27] : memref<1x1x1xf32, #tpu.memory_space<vmem>>, vector<1x1x1xf32>
    %50 = arith.addf %49, %48 : vector<1x1x1xf32>
    %c0_28 = arith.constant 0 : index
    %c0_29 = arith.constant 0 : index
    %c0_30 = arith.constant 0 : index
    %51 = vector.load %arg4[%c0_28, %c0_29, %c0_30] : memref<1x1x1xf32, #tpu.memory_space<vmem>>, vector<1x1x1xf32>
    tpu.vector_store %arg4[%c0_28, %c0_29, %c0_30], %50 {strides = array<i32>} : memref<1x1x1xf32, #tpu.memory_space<vmem>>, vector<1x1x1xf32>,
    return
  }
  func.func @transform_0(%arg0: i32, %arg1: i32) -> (i32, i32, i32) {
    %c2_i32 = arith.constant 2 : i32
    %0 = arith.muli %arg0, %c2_i32 : i32
    %1 = arith.addi %0, %arg1 : i32
    %c0_i32 = arith.constant 0 : i32
    %c0_i32_0 = arith.constant 0 : i32
    %c0_i32_1 = arith.constant 0 : i32
    return %1, %c0_i32, %c0_i32_0 : i32, i32, i32
  }
  func.func @transform_1(%arg0: i32, %arg1: i32) -> (i32, i32, i32) {
    %c2_i32 = arith.constant 2 : i32
    %0 = arith.muli %arg0, %c2_i32 : i32
    %1 = arith.addi %0, %arg1 : i32
    %c0_i32 = arith.constant 0 : i32
    %c0_i32_0 = arith.constant 0 : i32
    %c0_i32_1 = arith.constant 0 : i32
    return %1, %c0_i32, %c0_i32_0 : i32, i32, i32
  }
  func.func @transform_2(%arg0: i32, %arg1: i32) -> (i32, i32, i32) {
    %c0_i32 = arith.constant 0 : i32
    %c0_i32_0 = arith.constant 0 : i32
    %c0_i32_1 = arith.constant 0 : i32
    return %arg0, %c0_i32, %c0_i32_0 : i32, i32, i32
  }
}

</mosaic_0001>

<llo_original>
// kernel: dice_loss.1
$region0: #{dice_loss.1}
  #allocation0 [shape = 'u32[]', space=smem, size = 0x4, offset = 0x4, fixed_abs, tag = 'smem constant byte address 0x4 - core index']
  #allocation1 [shape = 'u32[144,128]{1,0:T(1,128)}', space=vmem, size = 0x12000, scoped, tag = 'internal scratch']
  %s0 = inlined_call_operand.hbm [shape: f32[4,256,256], index: 0, kind: input, shape index: {}]
  %s1 = inlined_call_operand.hbm [shape: f32[4,256,256], index: 1, kind: input, shape index: {}]
  %s2 = inlined_call_operand.vmem [shape: f32[2,1,1], index: 2, kind: output, shape index: {}]
  %s3 = sld [smem:[#allocation0]]
  $region53: #{dice_loss.1} parent=0
    _
  %s5 = ssub.s32 1, %s3
  %s6 = scalar_select 0, %s5, %s3
  $region1: #{dice_loss.1} parent=0
    #allocation2 [shape = 'u8[524288]{0}', space=vmem, size = 0x80000, scoped, tag = 'input window, operand 0']
    #allocation3 [shape = 's32[2]{0}', space=sflag, size = 0x8, scoped, tag = 'scoped memory for dice_loss.1']
    #allocation4 [shape = 'u8[524288]{0}', space=vmem, size = 0x80000, scoped, tag = 'input window, operand 1']
    #allocation5 [shape = 's32[2]{0}', space=sflag, size = 0x8, scoped, tag = 'scoped memory for dice_loss.1']
    %7 = vsyncpa [#allocation3], 0
    %s8 = scalar_lea.sflag [#allocation3], 1
    %9 = vsyncpa %s8, 0
    %10 = vsyncpa [#allocation5], 0
    %s11 = scalar_lea.sflag [#allocation5], 1
    %12 = vsyncpa %s11, 0
    loop: start=0, step=1, limit=6
    $region2: #{dice_loss.1} parent=1 // loop_pre_header
      _
    $region3: #{dice_loss.1} parent=1 // loop_header
      %s14 = sphi 0, %s18
      %p15 = scmp.ge.s32.totalorder %s14, 6
      %s21 = sphi 0, %s33
      %s22 = sphi 0, %s29
      %s23 = sphi 0, %s21
      %s24 = sphi 0, %s22
      %s25 = sphi 0, %s23
      %s26 = sphi 0, %s24
      %s40 = sphi 0, %s42
      %s43 = sphi 0, %s40
      %s44 = sphi 0, %s43
      %s60 = sphi 0, %s44
      %s70 = sphi 0, %s72
      %s73 = sphi 0, %s70
      %s74 = sphi 0, %s73
      %s90 = sphi 0, %s74
      %s96 = sphi 0, %s98
      %s99 = sphi 0, %s96
      %s100 = sphi 0, %s99
      %s116 = sphi 0, %s100
    $region4: #{dice_loss.1} parent=1 // loop_header_branch
      %17 = sbr.rel (%p15) target = $region8
    $region5: #{dice_loss.1} parent=1 // loop_body
      %s19 = ssub.s32 %s14, 1
      %s20 = ssub.s32 %s14, 2
      %s27 = sadd.s32 1, %s22
      %p28 = scmp.ge.s32.totalorder %s27, 2
      %s29 = scalar_select %p28, 0, %s27
      %s30 = sadd.s32 1, %s21
      %s31 = scalar_select %p28, %s30, %s21
      %p32 = scmp.ge.s32.totalorder %s31, 2
      %s33 = scalar_select %p32, 0, %s31
      %s34 = smul.u32 %s21, 2
      %s35 = sadd.s32 %s34, %s22
      %s36 = smul.u32 %s33, 2
      %s37 = sadd.s32 %s36, %s29
      %s38 = ssub.s32 %s35, %s37
      %p39 = scmp.eq.s32.totalorder %s38, 0
      %s41 = sadd.s32 %s40, 1
      %s42 = scalar_select %p39, %s40, %s41
      %p45 = pneg %p39
      %p46 = scmp.eq.s32.totalorder %s14, 3
      %p47 = por %p45, %p46
      %p48 = scmp.ne.s32.totalorder %s40, %s43
      %p49 = scmp.eq.s32.totalorder %s14, 0
      %p50 = por %p48, %p49
      %p51 = scmp.ne.s32.totalorder %s40, %s43
      %p52 = scmp.eq.s32.totalorder %s19, 3
      %p53 = por %p51, %p52
      %p54 = scmp.ne.s32.totalorder %s43, %s44
      %p55 = scmp.eq.s32.totalorder %s19, 0
      %p56 = por %p54, %p55
      %p57 = scmp.ne.s32.totalorder %s43, %s44
      %p58 = scmp.eq.s32.totalorder %s20, 3
      %p59 = por %p57, %p58
      %p61 = scmp.ne.s32.totalorder %s44, %s60
      %p62 = scmp.eq.s32.totalorder %s20, 0
      %p63 = por %p61, %p62
      %s64 = smul.u32 %s21, 2
      %s65 = sadd.s32 %s64, %s22
      %s66 = smul.u32 %s33, 2
      %s67 = sadd.s32 %s66, %s29
      %s68 = ssub.s32 %s65, %s67
      %p69 = scmp.eq.s32.totalorder %s68, 0
      %s71 = sadd.s32 %s70, 1
      %s72 = scalar_select %p69, %s70, %s71
      %p75 = pneg %p69
      %p76 = scmp.eq.s32.totalorder %s14, 3
      %p77 = por %p75, %p76
      %p78 = scmp.ne.s32.totalorder %s70, %s73
      %p79 = scmp.eq.s32.totalorder %s14, 0
      %p80 = por %p78, %p79
      %p81 = scmp.ne.s32.totalorder %s70, %s73
      %p82 = scmp.eq.s32.totalorder %s19, 3
      %p83 = por %p81, %p82
      %p84 = scmp.ne.s32.totalorder %s73, %s74
      %p85 = scmp.eq.s32.totalorder %s19, 0
      %p86 = por %p84, %p85
      %p87 = scmp.ne.s32.totalorder %s73, %s74
      %p88 = scmp.eq.s32.totalorder %s20, 3
      %p89 = por %p87, %p88
      %p91 = scmp.ne.s32.totalorder %s74, %s90
      %p92 = scmp.eq.s32.totalorder %s20, 0
      %p93 = por %p91, %p92
      %s94 = ssub.s32 %s21, %s33
      %p95 = scmp.eq.s32.totalorder %s94, 0
      %s97 = sadd.s32 %s96, 1
      %s98 = scalar_select %p95, %s96, %s97
      %p101 = pneg %p95
      %p102 = scmp.eq.s32.totalorder %s14, 3
      %p103 = por %p101, %p102
      %p104 = scmp.ne.s32.totalorder %s96, %s99
      %p105 = scmp.eq.s32.totalorder %s14, 0
      %p106 = por %p104, %p105
      %p107 = scmp.ne.s32.totalorder %s96, %s99
      %p108 = scmp.eq.s32.totalorder %s19, 3
      %p109 = por %p107, %p108
      %p110 = scmp.ne.s32.totalorder %s99, %s100
      %p111 = scmp.eq.s32.totalorder %s19, 0
      %p112 = por %p110, %p111
      %p113 = scmp.ne.s32.totalorder %s99, %s100
      %p114 = scmp.eq.s32.totalorder %s20, 3
      %p115 = por %p113, %p114
      %p117 = scmp.ne.s32.totalorder %s100, %s116
      %p118 = scmp.eq.s32.totalorder %s20, 0
      %p119 = por %p117, %p118
      %p120 = scmp.le.s32.totalorder 1, %s14
      %p121 = scmp.lt.s32.totalorder %s14, 5
      %p122 = pnand %p120, %p121
      %p123 = pneg %p122
      // Predicated region
      $region9: #{dice_loss.1} parent=5 // pred_check
        _
      $region10: #{dice_loss.1} parent=5 // pred_check_branch
        %125 = sbr.rel (%p122) target = $region12
      $region11: #{dice_loss.1} parent=5 // pred_region
        %s126 = ssub.s32 %s14, 1
      $region12: #{dice_loss.1} parent=5 // pred_fallthru
        _
      %p127 = scmp.lt.s32.totalorder %s14, 4
      // Predicated region
      $region13: #{dice_loss.1} parent=5 // pred_check
        %p128 = pneg %p127
      $region14: #{dice_loss.1} parent=5 // pred_check_branch
        %130 = sbr.rel (%p128) target = $region16
      $region15: #{dice_loss.1} parent=5 // pred_region
        // Predicated region
        $region17: #{dice_loss.1} parent=15 // pred_check
          %p131 = pneg %p50
        $region18: #{dice_loss.1} parent=15 // pred_check_branch
          %133 = sbr.rel (%p131) target = $region20
        $region19: #{dice_loss.1} parent=15 // pred_region
          %s134 = sand.u32 %s40, 1
          %s135 = scalar_lea.sflag [#allocation3], %s134
          %s136 = sand.u32 %s40, 1
          %s137 = smul.addr %s136, 512
          %s138 = scalar_lea.vmem [#allocation2], %s137
          %s139 = smul.u32 %s21, 2
          %s140 = sadd.s32 %s139, %s22
          %s142 = ssub.s32 8192, 8192
          %143 = vsyncadd %s135, %s142
          %s144 = smul.addr %s140, 64
          %s145 = smul.addr %s144, 128
          %s146 = scalar_lea.hbm %s0, %s145
          %s147 = sshll.u32 %s138, 4
          %s148 = int_to_ptr.vmem [resolvable:$true] %s147
          %153 = dma.hbm_to_vmem [thread:$0]  %s146, 8192, %s148, %s135, 256, 256, 16
        $region20: #{dice_loss.1} parent=15 // pred_fallthru
          _
        // Predicated region
        $region21: #{dice_loss.1} parent=15 // pred_check
          %p154 = pneg %p80
        $region22: #{dice_loss.1} parent=15 // pred_check_branch
          %156 = sbr.rel (%p154) target = $region24
        $region23: #{dice_loss.1} parent=15 // pred_region
          %s157 = sand.u32 %s70, 1
          %s158 = scalar_lea.sflag [#allocation5], %s157
          %s159 = sand.u32 %s70, 1
          %s160 = smul.addr %s159, 512
          %s161 = scalar_lea.vmem [#allocation4], %s160
          %s162 = smul.u32 %s21, 2
          %s163 = sadd.s32 %s162, %s22
          %s165 = ssub.s32 8192, 8192
          %166 = vsyncadd %s158, %s165
          %s167 = smul.addr %s163, 64
          %s168 = smul.addr %s167, 128
          %s169 = scalar_lea.hbm %s1, %s168
          %s170 = sshll.u32 %s161, 4
          %s171 = int_to_ptr.vmem [resolvable:$true] %s170
          %176 = dma.hbm_to_vmem [thread:$0]  %s169, 8192, %s171, %s158, 256, 256, 16
        $region24: #{dice_loss.1} parent=15 // pred_fallthru
          _
      $region16: #{dice_loss.1} parent=5 // pred_fallthru
        _
      %p177 = scmp.le.s32.totalorder 1, %s14
      %p178 = scmp.lt.s32.totalorder %s14, 5
      %p179 = pnand %p177, %p178
      %p180 = pneg %p179
      // Predicated region
      $region25: #{dice_loss.1} parent=5 // pred_check
        _
      $region26: #{dice_loss.1} parent=5 // pred_check_branch
        %182 = sbr.rel (%p179) target = $region28
      $region27: #{dice_loss.1} parent=5 // pred_region
        %s183 = ssub.s32 %s14, 1
        %s184 = sand.u32 %s43, 1
        %s185 = scalar_lea.sflag [#allocation3], %s184
        %s186 = sand.u32 %s43, 1
        %s187 = smul.addr %s186, 512
        %s188 = scalar_lea.vmem [#allocation2], %s187
        // Predicated region
        $region29: #{dice_loss.1} parent=27 // pred_check
          %p189 = pneg %p56
        $region30: #{dice_loss.1} parent=27 // pred_check_branch
          %191 = sbr.rel (%p189) target = $region32
        $region31: #{dice_loss.1} parent=27 // pred_region
          %192 = dma.done %s185, 8192
        $region32: #{dice_loss.1} parent=27 // pred_fallthru
          _
        %s193 = sand.u32 %s73, 1
        %s194 = scalar_lea.sflag [#allocation5], %s193
        %s195 = sand.u32 %s73, 1
        %s196 = smul.addr %s195, 512
        %s197 = scalar_lea.vmem [#allocation4], %s196
        // Predicated region
        $region33: #{dice_loss.1} parent=27 // pred_check
          %p198 = pneg %p86
        $region34: #{dice_loss.1} parent=27 // pred_check_branch
          %200 = sbr.rel (%p198) target = $region36
        $region35: #{dice_loss.1} parent=27 // pred_region
          %201 = dma.done %s194, 8192
        $region36: #{dice_loss.1} parent=27 // pred_fallthru
          _
        %s202 = sand.u32 %s43, 1
        %s203 = scalar_lea.sflag [#allocation3], %s202
        %s204 = sand.u32 %s43, 1
        %s205 = smul.addr %s204, 512
        %s206 = scalar_lea.vmem [#allocation2], %s205
        %p207 = pneg %p56
        %p208 = pneg %p53
        %s209 = sand.u32 %s73, 1
        %s210 = scalar_lea.sflag [#allocation5], %s209
        %s211 = sand.u32 %s73, 1
        %s212 = smul.addr %s211, 512
        %s213 = scalar_lea.vmem [#allocation4], %s212
        %p214 = pneg %p86
        %p215 = pneg %p83
        %p216 = pneg %p112
        %p217 = pneg %p109
        %p218 = scmp.lt.s32.totalorder %s23, 1
        %s219 = scalar_select %p218, %s23, 1
        %s220 = scalar_lea.vmem %s2, %s219
        %s221 = smul.u32 %s23, 2
        %s222 = sadd.s32 %s221, %s24
        %s223 = smul.u32 %s23, 2
        %s224 = sadd.s32 %s223, %s24
        %p225 = scmp.lt.s32.totalorder %s23, 1
        %s226 = scalar_select %p225, %s23, 1
        %s227 = scalar_lea.vmem %s2, %s226
        %p228 = scmp.eq.s32.totalorder %s24, 0
        // Predicated region
        $region37: #{dice_loss.1} parent=27 // pred_check
          %p229 = pneg %p228
        $region38: #{dice_loss.1} parent=27 // pred_check_branch
          %231 = sbr.rel (%p229) target = $region40
        $region39: #{dice_loss.1} parent=27 // pred_region
          %vm232 = vcmask 0
          %233 = vst.msk [vmem:[%s227] sm:$0x1] %vm232, 0.0
        $region40: #{dice_loss.1} parent=27 // pred_fallthru
          _
        %v234 = vld [vmem:[%s188] sm:$0xff]
        %v235 = vld [vmem:[%s188 + $0x8] sm:$0xff]
        %v236 = vld [vmem:[%s188 + $0x10] sm:$0xff]
        %v237 = vld [vmem:[%s188 + $0x18] sm:$0xff]
        %v238 = vld [vmem:[%s188 + $0x20] sm:$0xff]
        %v239 = vld [vmem:[%s188 + $0x28] sm:$0xff]
        %v240 = vld [vmem:[%s188 + $0x30] sm:$0xff]
        %v241 = vld [vmem:[%s188 + $0x38] sm:$0xff]
        %v242 = vld [vmem:[%s188 + $0x40] sm:$0xff]
        %v243 = vld [vmem:[%s188 + $0x48] sm:$0xff]
        %v244 = vld [vmem:[%s188 + $0x50] sm:$0xff]
        %v245 = vld [vmem:[%s188 + $0x58] sm:$0xff]
        %v246 = vld [vmem:[%s188 + $0x60] sm:$0xff]
        %v247 = vld [vmem:[%s188 + $0x68] sm:$0xff]
        %v248 = vld [vmem:[%s188 + $0x70] sm:$0xff]
        %v249 = vld [vmem:[%s188 + $0x78] sm:$0xff]
        %v250 = vld [vmem:[%s188 + $0x80] sm:$0xff]
        %v251 = vld [vmem:[%s188 + $0x88] sm:$0xff]
        %v252 = vld [vmem:[%s188 + $0x90] sm:$0xff]
        %v253 = vld [vmem:[%s188 + $0x98] sm:$0xff]
        %v254 = vld [vmem:[%s188 + $0xa0] sm:$0xff]
        %v255 = vld [vmem:[%s188 + $0xa8] sm:$0xff]
        %v256 = vld [vmem:[%s188 + $0xb0] sm:$0xff]
        %v257 = vld [vmem:[%s188 + $0xb8] sm:$0xff]
        %v258 = vld [vmem:[%s188 + $0xc0] sm:$0xff]
        %v259 = vld [vmem:[%s188 + $0xc8] sm:$0xff]
        %v260 = vld [vmem:[%s188 + $0xd0] sm:$0xff]
        %v261 = vld [vmem:[%s188 + $0xd8] sm:$0xff]
        %v262 = vld [vmem:[%s188 + $0xe0] sm:$0xff]
        %v263 = vld [vmem:[%s188 + $0xe8] sm:$0xff]
        %v264 = vld [vmem:[%s188 + $0xf0] sm:$0xff]
        %v265 = vld [vmem:[%s188 + $0xf8] sm:$0xff]
        %v266 = vld [vmem:[%s188 + $0x100] sm:$0xff]
        %v267 = vld [vmem:[%s188 + $0x108] sm:$0xff]
        %v268 = vld [vmem:[%s188 + $0x110] sm:$0xff]
        %v269 = vld [vmem:[%s188 + $0x118] sm:$0xff]
        %v270 = vld [vmem:[%s188 + $0x120] sm:$0xff]
        %v271 = vld [vmem:[%s188 + $0x128] sm:$0xff]
        %v272 = vld [vmem:[%s188 + $0x130] sm:$0xff]
        %v273 = vld [vmem:[%s188 + $0x138] sm:$0xff]
        %v274 = vld [vmem:[%s188 + $0x140] sm:$0xff]
        %v275 = vld [vmem:[%s188 + $0x148] sm:$0xff]
        %v276 = vld [vmem:[%s188 + $0x150] sm:$0xff]
        %v277 = vld [vmem:[%s188 + $0x158] sm:$0xff]
        %v278 = vld [vmem:[%s188 + $0x160] sm:$0xff]
        %v279 = vld [vmem:[%s188 + $0x168] sm:$0xff]
        %v280 = vld [vmem:[%s188 + $0x170] sm:$0xff]
        %v281 = vld [vmem:[%s188 + $0x178] sm:$0xff]
        %v282 = vld [vmem:[%s188 + $0x180] sm:$0xff]
        %v283 = vld [vmem:[%s188 + $0x188] sm:$0xff]
        %v284 = vld [vmem:[%s188 + $0x190] sm:$0xff]
        %v285 = vld [vmem:[%s188 + $0x198] sm:$0xff]
        %v286 = vld [vmem:[%s188 + $0x1a0] sm:$0xff]
        %v287 = vld [vmem:[%s188 + $0x1a8] sm:$0xff]
        %v288 = vld [vmem:[%s188 + $0x1b0] sm:$0xff]
        %v289 = vld [vmem:[%s188 + $0x1b8] sm:$0xff]
        %v290 = vld [vmem:[%s188 + $0x1c0] sm:$0xff]
        %v291 = vld [vmem:[%s188 + $0x1c8] sm:$0xff]
        %v292 = vld [vmem:[%s188 + $0x1d0] sm:$0xff]
        %v293 = vld [vmem:[%s188 + $0x1d8] sm:$0xff]
        %v294 = vld [vmem:[%s188 + $0x1e0] sm:$0xff]
        %v295 = vld [vmem:[%s188 + $0x1e8] sm:$0xff]
        %v296 = vld [vmem:[%s188 + $0x1f0] sm:$0xff]
        %v297 = vld [vmem:[%s188 + $0x1f8] sm:$0xff]
        %v298 = vld [vmem:[%s197] sm:$0xff]
        %v299 = vld [vmem:[%s197 + $0x8] sm:$0xff]
        %v300 = vld [vmem:[%s197 + $0x10] sm:$0xff]
        %v301 = vld [vmem:[%s197 + $0x18] sm:$0xff]
        %v302 = vld [vmem:[%s197 + $0x20] sm:$0xff]
        %v303 = vld [vmem:[%s197 + $0x28] sm:$0xff]
        %v304 = vld [vmem:[%s197 + $0x30] sm:$0xff]
        %v305 = vld [vmem:[%s197 + $0x38] sm:$0xff]
        %v306 = vld [vmem:[%s197 + $0x40] sm:$0xff]
        %v307 = vld [vmem:[%s197 + $0x48] sm:$0xff]
        %v308 = vld [vmem:[%s197 + $0x50] sm:$0xff]
        %v309 = vld [vmem:[%s197 + $0x58] sm:$0xff]
        %v310 = vld [vmem:[%s197 + $0x60] sm:$0xff]
        %v311 = vld [vmem:[%s197 + $0x68] sm:$0xff]
        %v312 = vld [vmem:[%s197 + $0x70] sm:$0xff]
        %v313 = vld [vmem:[%s197 + $0x78] sm:$0xff]
        %v314 = vld [vmem:[%s197 + $0x80] sm:$0xff]
        %v315 = vld [vmem:[%s197 + $0x88] sm:$0xff]
        %v316 = vld [vmem:[%s197 + $0x90] sm:$0xff]
        %v317 = vld [vmem:[%s197 + $0x98] sm:$0xff]
        %v318 = vld [vmem:[%s197 + $0xa0] sm:$0xff]
        %v319 = vld [vmem:[%s197 + $0xa8] sm:$0xff]
        %v320 = vld [vmem:[%s197 + $0xb0] sm:$0xff]
        %v321 = vld [vmem:[%s197 + $0xb8] sm:$0xff]
        %v322 = vld [vmem:[%s197 + $0xc0] sm:$0xff]
        %v323 = vld [vmem:[%s197 + $0xc8] sm:$0xff]
        %v324 = vld [vmem:[%s197 + $0xd0] sm:$0xff]
        %v325 = vld [vmem:[%s197 + $0xd8] sm:$0xff]
        %v326 = vld [vmem:[%s197 + $0xe0] sm:$0xff]
        %v327 = vld [vmem:[%s197 + $0xe8] sm:$0xff]
        %v328 = vld [vmem:[%s197 + $0xf0] sm:$0xff]
        %v329 = vld [vmem:[%s197 + $0xf8] sm:$0xff]
        %v330 = vld [vmem:[%s197 + $0x100] sm:$0xff]
        %v331 = vld [vmem:[%s197 + $0x108] sm:$0xff]
        %v332 = vld [vmem:[%s197 + $0x110] sm:$0xff]
        %v333 = vld [vmem:[%s197 + $0x118] sm:$0xff]
        %v334 = vld [vmem:[%s197 + $0x120] sm:$0xff]
        %v335 = vld [vmem:[%s197 + $0x128] sm:$0xff]
        %v336 = vld [vmem:[%s197 + $0x130] sm:$0xff]
        %v337 = vld [vmem:[%s197 + $0x138] sm:$0xff]
        %v338 = vld [vmem:[%s197 + $0x140] sm:$0xff]
        %v339 = vld [vmem:[%s197 + $0x148] sm:$0xff]
        %v340 = vld [vmem:[%s197 + $0x150] sm:$0xff]
        %v341 = vld [vmem:[%s197 + $0x158] sm:$0xff]
        %v342 = vld [vmem:[%s197 + $0x160] sm:$0xff]
        %v343 = vld [vmem:[%s197 + $0x168] sm:$0xff]
        %v344 = vld [vmem:[%s197 + $0x170] sm:$0xff]
        %v345 = vld [vmem:[%s197 + $0x178] sm:$0xff]
        %v346 = vld [vmem:[%s197 + $0x180] sm:$0xff]
        %v347 = vld [vmem:[%s197 + $0x188] sm:$0xff]
        %v348 = vld [vmem:[%s197 + $0x190] sm:$0xff]
        %v349 = vld [vmem:[%s197 + $0x198] sm:$0xff]
        %v350 = vld [vmem:[%s197 + $0x1a0] sm:$0xff]
        %v351 = vld [vmem:[%s197 + $0x1a8] sm:$0xff]
        %v352 = vld [vmem:[%s197 + $0x1b0] sm:$0xff]
        %v353 = vld [vmem:[%s197 + $0x1b8] sm:$0xff]
        %v354 = vld [vmem:[%s197 + $0x1c0] sm:$0xff]
        %v355 = vld [vmem:[%s197 + $0x1c8] sm:$0xff]
        %v356 = vld [vmem:[%s197 + $0x1d0] sm:$0xff]
        %v357 = vld [vmem:[%s197 + $0x1d8] sm:$0xff]
        %v358 = vld [vmem:[%s197 + $0x1e0] sm:$0xff]
        %v359 = vld [vmem:[%s197 + $0x1e8] sm:$0xff]
        %v360 = vld [vmem:[%s197 + $0x1f0] sm:$0xff]
        %v361 = vld [vmem:[%s197 + $0x1f8] sm:$0xff]
        %362 = vxpose.xlu0.b32.start [1/16] %v298, 128
        %363 = vxpose.xlu0.b32.cont [2/16] %v300, 128
        %364 = vxpose.xlu0.b32.cont [3/16] %v302, 128
        %365 = vxpose.xlu0.b32.cont [4/16] %v304, 128
        %366 = vxpose.xlu0.b32.cont [5/16] %v306, 128
        %367 = vxpose.xlu0.b32.cont [6/16] %v308, 128
        %368 = vxpose.xlu0.b32.cont [7/16] %v310, 128
        %369 = vxpose.xlu0.b32.cont [8/16] %v312, 128
        %370 = vxpose.xlu0.b32.cont [9/16] %v314, 128
        %371 = vxpose.xlu0.b32.cont [10/16] %v316, 128
        %372 = vxpose.xlu0.b32.cont [11/16] %v318, 128
        %373 = vxpose.xlu0.b32.cont [12/16] %v320, 128
        %374 = vxpose.xlu0.b32.cont [13/16] %v322, 128
        %375 = vxpose.xlu0.b32.cont [14/16] %v324, 128
        %376 = vxpose.xlu0.b32.cont [15/16] %v326, 128
        %377 = vxpose.xlu0.b32.end [16/16] %v328, 128
        %v378 = vpop.trf.xlu0
        %v379 = vpop.trf.xlu0
        %v380 = vpop.trf.xlu0
        %v381 = vpop.trf.xlu0
        %v382 = vpop.trf.xlu0
        %v383 = vpop.trf.xlu0
        %v384 = vpop.trf.xlu0
        %v385 = vpop.trf.xlu0
        %v386 = vpop.trf.xlu0
        %v387 = vpop.trf.xlu0
        %v388 = vpop.trf.xlu0
        %v389 = vpop.trf.xlu0
        %v390 = vpop.trf.xlu0
        %v391 = vpop.trf.xlu0
        %v392 = vpop.trf.xlu0
        %v393 = vpop.trf.xlu0
        %394 = vxpose.xlu0.b32.start [1/16] %v299, 128
        %395 = vxpose.xlu0.b32.cont [2/16] %v301, 128
        %396 = vxpose.xlu0.b32.cont [3/16] %v303, 128
        %397 = vxpose.xlu0.b32.cont [4/16] %v305, 128
        %398 = vxpose.xlu0.b32.cont [5/16] %v307, 128
        %399 = vxpose.xlu0.b32.cont [6/16] %v309, 128
        %400 = vxpose.xlu0.b32.cont [7/16] %v311, 128
        %401 = vxpose.xlu0.b32.cont [8/16] %v313, 128
        %402 = vxpose.xlu0.b32.cont [9/16] %v315, 128
        %403 = vxpose.xlu0.b32.cont [10/16] %v317, 128
        %404 = vxpose.xlu0.b32.cont [11/16] %v319, 128
        %405 = vxpose.xlu0.b32.cont [12/16] %v321, 128
        %406 = vxpose.xlu0.b32.cont [13/16] %v323, 128
        %407 = vxpose.xlu0.b32.cont [14/16] %v325, 128
        %408 = vxpose.xlu0.b32.cont [15/16] %v327, 128
        %409 = vxpose.xlu0.b32.end [16/16] %v329, 128
        %v410 = vpop.trf.xlu0
        %v411 = vpop.trf.xlu0
        %v412 = vpop.trf.xlu0
        %v413 = vpop.trf.xlu0
        %v414 = vpop.trf.xlu0
        %v415 = vpop.trf.xlu0
        %v416 = vpop.trf.xlu0
        %v417 = vpop.trf.xlu0
        %v418 = vpop.trf.xlu0
        %v419 = vpop.trf.xlu0
        %v420 = vpop.trf.xlu0
        %v421 = vpop.trf.xlu0
        %v422 = vpop.trf.xlu0
        %v423 = vpop.trf.xlu0
        %v424 = vpop.trf.xlu0
        %v425 = vpop.trf.xlu0
        %426 = vxpose.xlu0.b32.start [1/16] %v330, 128
        %427 = vxpose.xlu0.b32.cont [2/16] %v332, 128
        %428 = vxpose.xlu0.b32.cont [3/16] %v334, 128
        %429 = vxpose.xlu0.b32.cont [4/16] %v336, 128
        %430 = vxpose.xlu0.b32.cont [5/16] %v338, 128
        %431 = vxpose.xlu0.b32.cont [6/16] %v340, 128
        %432 = vxpose.xlu0.b32.cont [7/16] %v342, 128
        %433 = vxpose.xlu0.b32.cont [8/16] %v344, 128
        %434 = vxpose.xlu0.b32.cont [9/16] %v346, 128
        %435 = vxpose.xlu0.b32.cont [10/16] %v348, 128
        %436 = vxpose.xlu0.b32.cont [11/16] %v350, 128
        %437 = vxpose.xlu0.b32.cont [12/16] %v352, 128
        %438 = vxpose.xlu0.b32.cont [13/16] %v354, 128
        %439 = vxpose.xlu0.b32.cont [14/16] %v356, 128
        %440 = vxpose.xlu0.b32.cont [15/16] %v358, 128
        %441 = vxpose.xlu0.b32.end [16/16] %v360, 128
        %v442 = vpop.trf.xlu0
        %v443 = vpop.trf.xlu0
        %v444 = vpop.trf.xlu0
        %v445 = vpop.trf.xlu0
        %v446 = vpop.trf.xlu0
        %v447 = vpop.trf.xlu0
        %v448 = vpop.trf.xlu0
        %v449 = vpop.trf.xlu0
        %v450 = vpop.trf.xlu0
        %v451 = vpop.trf.xlu0
        %v452 = vpop.trf.xlu0
        %v453 = vpop.trf.xlu0
        %v454 = vpop.trf.xlu0
        %v455 = vpop.trf.xlu0
        %v456 = vpop.trf.xlu0
        %v457 = vpop.trf.xlu0
        %458 = vxpose.xlu0.b32.start [1/16] %v331, 128
        %459 = vxpose.xlu0.b32.cont [2/16] %v333, 128
        %460 = vxpose.xlu0.b32.cont [3/16] %v335, 128
        %461 = vxpose.xlu0.b32.cont [4/16] %v337, 128
        %462 = vxpose.xlu0.b32.cont [5/16] %v339, 128
        %463 = vxpose.xlu0.b32.cont [6/16] %v341, 128
        %464 = vxpose.xlu0.b32.cont [7/16] %v343, 128
        %465 = vxpose.xlu0.b32.cont [8/16] %v345, 128
        %466 = vxpose.xlu0.b32.cont [9/16] %v347, 128
        %467 = vxpose.xlu0.b32.cont [10/16] %v349, 128
        %468 = vxpose.xlu0.b32.cont [11/16] %v351, 128
        %469 = vxpose.xlu0.b32.cont [12/16] %v353, 128
        %470 = vxpose.xlu0.b32.cont [13/16] %v355, 128
        %471 = vxpose.xlu0.b32.cont [14/16] %v357, 128
        %472 = vxpose.xlu0.b32.cont [15/16] %v359, 128
        %473 = vxpose.xlu0.b32.end [16/16] %v361, 128
        %v474 = vpop.trf.xlu0
        %v475 = vpop.trf.xlu0
        %v476 = vpop.trf.xlu0
        %v477 = vpop.trf.xlu0
        %v478 = vpop.trf.xlu0
        %v479 = vpop.trf.xlu0
        %v480 = vpop.trf.xlu0
        %v481 = vpop.trf.xlu0
        %v482 = vpop.trf.xlu0
        %v483 = vpop.trf.xlu0
        %v484 = vpop.trf.xlu0
        %v485 = vpop.trf.xlu0
        %v486 = vpop.trf.xlu0
        %v487 = vpop.trf.xlu0
        %v488 = vpop.trf.xlu0
        %v489 = vpop.trf.xlu0
        %v490 = vmul.f32 %v234, %v378
        %v491 = vmul.f32 %v235, %v442
        %v492 = vmul.f32 %v236, %v379
        %v493 = vmul.f32 %v237, %v443
        %v494 = vmul.f32 %v238, %v380
        %v495 = vmul.f32 %v239, %v444
        %v496 = vmul.f32 %v240, %v381
        %v497 = vmul.f32 %v241, %v445
        %v498 = vmul.f32 %v242, %v382
        %v499 = vmul.f32 %v243, %v446
        %v500 = vmul.f32 %v244, %v383
        %v501 = vmul.f32 %v245, %v447
        %v502 = vmul.f32 %v246, %v384
        %v503 = vmul.f32 %v247, %v448
        %v504 = vmul.f32 %v248, %v385
        %v505 = vmul.f32 %v249, %v449
        %v506 = vmul.f32 %v250, %v386
        %v507 = vmul.f32 %v251, %v450
        %v508 = vmul.f32 %v252, %v387
        %v509 = vmul.f32 %v253, %v451
        %v510 = vmul.f32 %v254, %v388
        %v511 = vmul.f32 %v255, %v452
        %v512 = vmul.f32 %v256, %v389
        %v513 = vmul.f32 %v257, %v453
        %v514 = vmul.f32 %v258, %v390
        %v515 = vmul.f32 %v259, %v454
        %v516 = vmul.f32 %v260, %v391
        %v517 = vmul.f32 %v261, %v455
        %v518 = vmul.f32 %v262, %v392
        %v519 = vmul.f32 %v263, %v456
        %v520 = vmul.f32 %v264, %v393
        %v521 = vmul.f32 %v265, %v457
        %v522 = vmul.f32 %v266, %v410
        %v523 = vmul.f32 %v267, %v474
        %v524 = vmul.f32 %v268, %v411
        %v525 = vmul.f32 %v269, %v475
        %v526 = vmul.f32 %v270, %v412
        %v527 = vmul.f32 %v271, %v476
        %v528 = vmul.f32 %v272, %v413
        %v529 = vmul.f32 %v273, %v477
        %v530 = vmul.f32 %v274, %v414
        %v531 = vmul.f32 %v275, %v478
        %v532 = vmul.f32 %v276, %v415
        %v533 = vmul.f32 %v277, %v479
        %v534 = vmul.f32 %v278, %v416
        %v535 = vmul.f32 %v279, %v480
        %v536 = vmul.f32 %v280, %v417
        %v537 = vmul.f32 %v281, %v481
        %v538 = vmul.f32 %v282, %v418
        %v539 = vmul.f32 %v283, %v482
        %v540 = vmul.f32 %v284, %v419
        %v541 = vmul.f32 %v285, %v483
        %v542 = vmul.f32 %v286, %v420
        %v543 = vmul.f32 %v287, %v484
        %v544 = vmul.f32 %v288, %v421
        %v545 = vmul.f32 %v289, %v485
        %v546 = vmul.f32 %v290, %v422
        %v547 = vmul.f32 %v291, %v486
        %v548 = vmul.f32 %v292, %v423
        %v549 = vmul.f32 %v293, %v487
        %v550 = vmul.f32 %v294, %v424
        %v551 = vmul.f32 %v295, %v488
        %v552 = vmul.f32 %v296, %v425
        %v553 = vmul.f32 %v297, %v489
        %v554 = vadd.f32 %v490, %v491
        %555 = vadd.xlane.f32.xlu0 %v554
        %v556 = vpop.xlane.xlu0 %555
        %v557 = vadd.f32 %v492, %v493
        %558 = vadd.xlane.f32.xlu0 %v557
        %v559 = vpop.xlane.xlu0 %558
        %v560 = vadd.f32 %v494, %v495
        %561 = vadd.xlane.f32.xlu0 %v560
        %v562 = vpop.xlane.xlu0 %561
        %v563 = vadd.f32 %v496, %v497
        %564 = vadd.xlane.f32.xlu0 %v563
        %v565 = vpop.xlane.xlu0 %564
        %v566 = vadd.f32 %v498, %v499
        %567 = vadd.xlane.f32.xlu0 %v566
        %v568 = vpop.xlane.xlu0 %567
        %v569 = vadd.f32 %v500, %v501
        %570 = vadd.xlane.f32.xlu0 %v569
        %v571 = vpop.xlane.xlu0 %570
        %v572 = vadd.f32 %v502, %v503
        %573 = vadd.xlane.f32.xlu0 %v572
        %v574 = vpop.xlane.xlu0 %573
        %v575 = vadd.f32 %v504, %v505
        %576 = vadd.xlane.f32.xlu0 %v575
        %v577 = vpop.xlane.xlu0 %576
        %v578 = vadd.f32 %v506, %v507
        %579 = vadd.xlane.f32.xlu0 %v578
        %v580 = vpop.xlane.xlu0 %579
        %v581 = vadd.f32 %v508, %v509
        %582 = vadd.xlane.f32.xlu0 %v581
        %v583 = vpop.xlane.xlu0 %582
        %v584 = vadd.f32 %v510, %v511
        %585 = vadd.xlane.f32.xlu0 %v584
        %v586 = vpop.xlane.xlu0 %585
        %v587 = vadd.f32 %v512, %v513
        %588 = vadd.xlane.f32.xlu0 %v587
        %v589 = vpop.xlane.xlu0 %588
        %v590 = vadd.f32 %v514, %v515
        %591 = vadd.xlane.f32.xlu0 %v590
        %v592 = vpop.xlane.xlu0 %591
        %v593 = vadd.f32 %v516, %v517
        %594 = vadd.xlane.f32.xlu0 %v593
        %v595 = vpop.xlane.xlu0 %594
        %v596 = vadd.f32 %v518, %v519
        %597 = vadd.xlane.f32.xlu0 %v596
        %v598 = vpop.xlane.xlu0 %597
        %v599 = vadd.f32 %v520, %v521
        %600 = vadd.xlane.f32.xlu0 %v599
        %v601 = vpop.xlane.xlu0 %600
        %v602 = vadd.f32 %v522, %v523
        %603 = vadd.xlane.f32.xlu0 %v602
        %v604 = vpop.xlane.xlu0 %603
        %v605 = vadd.f32 %v524, %v525
        %606 = vadd.xlane.f32.xlu0 %v605
        %v607 = vpop.xlane.xlu0 %606
        %v608 = vadd.f32 %v526, %v527
        %609 = vadd.xlane.f32.xlu0 %v608
        %v610 = vpop.xlane.xlu0 %609
        %v611 = vadd.f32 %v528, %v529
        %612 = vadd.xlane.f32.xlu0 %v611
        %v613 = vpop.xlane.xlu0 %612
        %v614 = vadd.f32 %v530, %v531
        %615 = vadd.xlane.f32.xlu0 %v614
        %v616 = vpop.xlane.xlu0 %615
        %v617 = vadd.f32 %v532, %v533
        %618 = vadd.xlane.f32.xlu0 %v617
        %v619 = vpop.xlane.xlu0 %618
        %v620 = vadd.f32 %v534, %v535
        %621 = vadd.xlane.f32.xlu0 %v620
        %v622 = vpop.xlane.xlu0 %621
        %v623 = vadd.f32 %v536, %v537
        %624 = vadd.xlane.f32.xlu0 %v623
        %v625 = vpop.xlane.xlu0 %624
        %v626 = vadd.f32 %v538, %v539
        %627 = vadd.xlane.f32.xlu0 %v626
        %v628 = vpop.xlane.xlu0 %627
        %v629 = vadd.f32 %v540, %v541
        %630 = vadd.xlane.f32.xlu0 %v629
        %v631 = vpop.xlane.xlu0 %630
        %v632 = vadd.f32 %v542, %v543
        %633 = vadd.xlane.f32.xlu0 %v632
        %v634 = vpop.xlane.xlu0 %633
        %v635 = vadd.f32 %v544, %v545
        %636 = vadd.xlane.f32.xlu0 %v635
        %v637 = vpop.xlane.xlu0 %636
        %v638 = vadd.f32 %v546, %v547
        %639 = vadd.xlane.f32.xlu0 %v638
        %v640 = vpop.xlane.xlu0 %639
        %v641 = vadd.f32 %v548, %v549
        %642 = vadd.xlane.f32.xlu0 %v641
        %v643 = vpop.xlane.xlu0 %642
        %v644 = vadd.f32 %v550, %v551
        %645 = vadd.xlane.f32.xlu0 %v644
        %v646 = vpop.xlane.xlu0 %645
        %v647 = vadd.f32 %v552, %v553
        %648 = vadd.xlane.f32.xlu0 %v647
        %v649 = vpop.xlane.xlu0 %648
        %v650 = vadd.f32 %v556, %v559
        %v651 = vadd.f32 %v650, %v562
        %v652 = vadd.f32 %v651, %v565
        %v653 = vadd.f32 %v652, %v568
        %v654 = vadd.f32 %v653, %v571
        %v655 = vadd.f32 %v654, %v574
        %v656 = vadd.f32 %v655, %v577
        %v657 = vadd.f32 %v656, %v580
        %v658 = vadd.f32 %v657, %v583
        %v659 = vadd.f32 %v658, %v586
        %v660 = vadd.f32 %v659, %v589
        %v661 = vadd.f32 %v660, %v592
        %v662 = vadd.f32 %v661, %v595
        %v663 = vadd.f32 %v662, %v598
        %v664 = vadd.f32 %v663, %v601
        %v665 = vadd.f32 %v664, %v604
        %v666 = vadd.f32 %v665, %v607
        %v667 = vadd.f32 %v666, %v610
        %v668 = vadd.f32 %v667, %v613
        %v669 = vadd.f32 %v668, %v616
        %v670 = vadd.f32 %v669, %v619
        %v671 = vadd.f32 %v670, %v622
        %v672 = vadd.f32 %v671, %v625
        %v673 = vadd.f32 %v672, %v628
        %v674 = vadd.f32 %v673, %v631
        %v675 = vadd.f32 %v674, %v634
        %v676 = vadd.f32 %v675, %v637
        %v677 = vadd.f32 %v676, %v640
        %v678 = vadd.f32 %v677, %v643
        %v679 = vadd.f32 %v678, %v646
        %v680 = vadd.f32 %v679, %v649
        %v681 = vrot.slane %v680, 4
        %v682 = vadd.f32 %v680, %v681
        %v683 = vrot.slane %v682, 2
        %v684 = vadd.f32 %v682, %v683
        %v685 = vrot.slane %v684, 1
        %v686 = vadd.f32 %v684, %v685
        %v687 = vadd.f32 %v234, %v235
        %688 = vadd.xlane.f32.xlu0 %v687
        %v689 = vpop.xlane.xlu0 %688
        %v690 = vadd.f32 %v236, %v237
        %691 = vadd.xlane.f32.xlu0 %v690
        %v692 = vpop.xlane.xlu0 %691
        %v693 = vadd.f32 %v238, %v239
        %694 = vadd.xlane.f32.xlu0 %v693
        %v695 = vpop.xlane.xlu0 %694
        %v696 = vadd.f32 %v240, %v241
        %697 = vadd.xlane.f32.xlu0 %v696
        %v698 = vpop.xlane.xlu0 %697
        %v699 = vadd.f32 %v242, %v243
        %700 = vadd.xlane.f32.xlu0 %v699
        %v701 = vpop.xlane.xlu0 %700
        %v702 = vadd.f32 %v244, %v245
        %703 = vadd.xlane.f32.xlu0 %v702
        %v704 = vpop.xlane.xlu0 %703
        %v705 = vadd.f32 %v246, %v247
        %706 = vadd.xlane.f32.xlu0 %v705
        %v707 = vpop.xlane.xlu0 %706
        %v708 = vadd.f32 %v248, %v249
        %709 = vadd.xlane.f32.xlu0 %v708
        %v710 = vpop.xlane.xlu0 %709
        %v711 = vadd.f32 %v250, %v251
        %712 = vadd.xlane.f32.xlu0 %v711
        %v713 = vpop.xlane.xlu0 %712
        %v714 = vadd.f32 %v252, %v253
        %715 = vadd.xlane.f32.xlu0 %v714
        %v716 = vpop.xlane.xlu0 %715
        %v717 = vadd.f32 %v254, %v255
        %718 = vadd.xlane.f32.xlu0 %v717
        %v719 = vpop.xlane.xlu0 %718
        %v720 = vadd.f32 %v256, %v257
        %721 = vadd.xlane.f32.xlu0 %v720
        %v722 = vpop.xlane.xlu0 %721
        %v723 = vadd.f32 %v258, %v259
        %724 = vadd.xlane.f32.xlu0 %v723
        %v725 = vpop.xlane.xlu0 %724
        %v726 = vadd.f32 %v260, %v261
        %727 = vadd.xlane.f32.xlu0 %v726
        %v728 = vpop.xlane.xlu0 %727
        %v729 = vadd.f32 %v262, %v263
        %730 = vadd.xlane.f32.xlu0 %v729
        %v731 = vpop.xlane.xlu0 %730
        %v732 = vadd.f32 %v264, %v265
        %733 = vadd.xlane.f32.xlu0 %v732
        %v734 = vpop.xlane.xlu0 %733
        %v735 = vadd.f32 %v266, %v267
        %736 = vadd.xlane.f32.xlu0 %v735
        %v737 = vpop.xlane.xlu0 %736
        %v738 = vadd.f32 %v268, %v269
        %739 = vadd.xlane.f32.xlu0 %v738
        %v740 = vpop.xlane.xlu0 %739
        %v741 = vadd.f32 %v270, %v271
        %742 = vadd.xlane.f32.xlu0 %v741
        %v743 = vpop.xlane.xlu0 %742
        %v744 = vadd.f32 %v272, %v273
        %745 = vadd.xlane.f32.xlu0 %v744
        %v746 = vpop.xlane.xlu0 %745
        %v747 = vadd.f32 %v274, %v275
        %748 = vadd.xlane.f32.xlu0 %v747
        %v749 = vpop.xlane.xlu0 %748
        %v750 = vadd.f32 %v276, %v277
        %751 = vadd.xlane.f32.xlu0 %v750
        %v752 = vpop.xlane.xlu0 %751
        %v753 = vadd.f32 %v278, %v279
        %754 = vadd.xlane.f32.xlu0 %v753
        %v755 = vpop.xlane.xlu0 %754
        %v756 = vadd.f32 %v280, %v281
        %757 = vadd.xlane.f32.xlu0 %v756
        %v758 = vpop.xlane.xlu0 %757
        %v759 = vadd.f32 %v282, %v283
        %760 = vadd.xlane.f32.xlu0 %v759
        %v761 = vpop.xlane.xlu0 %760
        %v762 = vadd.f32 %v284, %v285
        %763 = vadd.xlane.f32.xlu0 %v762
        %v764 = vpop.xlane.xlu0 %763
        %v765 = vadd.f32 %v286, %v287
        %766 = vadd.xlane.f32.xlu0 %v765
        %v767 = vpop.xlane.xlu0 %766
        %v768 = vadd.f32 %v288, %v289
        %769 = vadd.xlane.f32.xlu0 %v768
        %v770 = vpop.xlane.xlu0 %769
        %v771 = vadd.f32 %v290, %v291
        %772 = vadd.xlane.f32.xlu0 %v771
        %v773 = vpop.xlane.xlu0 %772
        %v774 = vadd.f32 %v292, %v293
        %775 = vadd.xlane.f32.xlu0 %v774
        %v776 = vpop.xlane.xlu0 %775
        %v777 = vadd.f32 %v294, %v295
        %778 = vadd.xlane.f32.xlu0 %v777
        %v779 = vpop.xlane.xlu0 %778
        %v780 = vadd.f32 %v296, %v297
        %781 = vadd.xlane.f32.xlu0 %v780
        %v782 = vpop.xlane.xlu0 %781
        %v783 = vadd.f32 %v689, %v692
        %v784 = vadd.f32 %v783, %v695
        %v785 = vadd.f32 %v784, %v698
        %v786 = vadd.f32 %v785, %v701
        %v787 = vadd.f32 %v786, %v704
        %v788 = vadd.f32 %v787, %v707
        %v789 = vadd.f32 %v788, %v710
        %v790 = vadd.f32 %v789, %v713
        %v791 = vadd.f32 %v790, %v716
        %v792 = vadd.f32 %v791, %v719
        %v793 = vadd.f32 %v792, %v722
        %v794 = vadd.f32 %v793, %v725
        %v795 = vadd.f32 %v794, %v728
        %v796 = vadd.f32 %v795, %v731
        %v797 = vadd.f32 %v796, %v734
        %v798 = vadd.f32 %v797, %v737
        %v799 = vadd.f32 %v798, %v740
        %v800 = vadd.f32 %v799, %v743
        %v801 = vadd.f32 %v800, %v746
        %v802 = vadd.f32 %v801, %v749
        %v803 = vadd.f32 %v802, %v752
        %v804 = vadd.f32 %v803, %v755
        %v805 = vadd.f32 %v804, %v758
        %v806 = vadd.f32 %v805, %v761
        %v807 = vadd.f32 %v806, %v764
        %v808 = vadd.f32 %v807, %v767
        %v809 = vadd.f32 %v808, %v770
        %v810 = vadd.f32 %v809, %v773
        %v811 = vadd.f32 %v810, %v776
        %v812 = vadd.f32 %v811, %v779
        %v813 = vadd.f32 %v812, %v782
        %v814 = vrot.slane %v813, 4
        %v815 = vadd.f32 %v813, %v814
        %v816 = vrot.slane %v815, 2
        %v817 = vadd.f32 %v815, %v816
        %v818 = vrot.slane %v817, 1
        %v819 = vadd.f32 %v817, %v818
        %v820 = vadd.f32 %v298, %v299
        %821 = vadd.xlane.f32.xlu0 %v820
        %v822 = vpop.xlane.xlu0 %821
        %v823 = vadd.f32 %v300, %v301
        %824 = vadd.xlane.f32.xlu0 %v823
        %v825 = vpop.xlane.xlu0 %824
        %v826 = vadd.f32 %v302, %v303
        %827 = vadd.xlane.f32.xlu0 %v826
        %v828 = vpop.xlane.xlu0 %827
        %v829 = vadd.f32 %v304, %v305
        %830 = vadd.xlane.f32.xlu0 %v829
        %v831 = vpop.xlane.xlu0 %830
        %v832 = vadd.f32 %v306, %v307
        %833 = vadd.xlane.f32.xlu0 %v832
        %v834 = vpop.xlane.xlu0 %833
        %v835 = vadd.f32 %v308, %v309
        %836 = vadd.xlane.f32.xlu0 %v835
        %v837 = vpop.xlane.xlu0 %836
        %v838 = vadd.f32 %v310, %v311
        %839 = vadd.xlane.f32.xlu0 %v838
        %v840 = vpop.xlane.xlu0 %839
        %v841 = vadd.f32 %v312, %v313
        %842 = vadd.xlane.f32.xlu0 %v841
        %v843 = vpop.xlane.xlu0 %842
        %v844 = vadd.f32 %v314, %v315
        %845 = vadd.xlane.f32.xlu0 %v844
        %v846 = vpop.xlane.xlu0 %845
        %v847 = vadd.f32 %v316, %v317
        %848 = vadd.xlane.f32.xlu0 %v847
        %v849 = vpop.xlane.xlu0 %848
        %v850 = vadd.f32 %v318, %v319
        %851 = vadd.xlane.f32.xlu0 %v850
        %v852 = vpop.xlane.xlu0 %851
        %v853 = vadd.f32 %v320, %v321
        %854 = vadd.xlane.f32.xlu0 %v853
        %v855 = vpop.xlane.xlu0 %854
        %v856 = vadd.f32 %v322, %v323
        %857 = vadd.xlane.f32.xlu0 %v856
        %v858 = vpop.xlane.xlu0 %857
        %v859 = vadd.f32 %v324, %v325
        %860 = vadd.xlane.f32.xlu0 %v859
        %v861 = vpop.xlane.xlu0 %860
        %v862 = vadd.f32 %v326, %v327
        %863 = vadd.xlane.f32.xlu0 %v862
        %v864 = vpop.xlane.xlu0 %863
        %v865 = vadd.f32 %v328, %v329
        %866 = vadd.xlane.f32.xlu0 %v865
        %v867 = vpop.xlane.xlu0 %866
        %v868 = vadd.f32 %v330, %v331
        %869 = vadd.xlane.f32.xlu0 %v868
        %v870 = vpop.xlane.xlu0 %869
        %v871 = vadd.f32 %v332, %v333
        %872 = vadd.xlane.f32.xlu0 %v871
        %v873 = vpop.xlane.xlu0 %872
        %v874 = vadd.f32 %v334, %v335
        %875 = vadd.xlane.f32.xlu0 %v874
        %v876 = vpop.xlane.xlu0 %875
        %v877 = vadd.f32 %v336, %v337
        %878 = vadd.xlane.f32.xlu0 %v877
        %v879 = vpop.xlane.xlu0 %878
        %v880 = vadd.f32 %v338, %v339
        %881 = vadd.xlane.f32.xlu0 %v880
        %v882 = vpop.xlane.xlu0 %881
        %v883 = vadd.f32 %v340, %v341
        %884 = vadd.xlane.f32.xlu0 %v883
        %v885 = vpop.xlane.xlu0 %884
        %v886 = vadd.f32 %v342, %v343
        %887 = vadd.xlane.f32.xlu0 %v886
        %v888 = vpop.xlane.xlu0 %887
        %v889 = vadd.f32 %v344, %v345
        %890 = vadd.xlane.f32.xlu0 %v889
        %v891 = vpop.xlane.xlu0 %890
        %v892 = vadd.f32 %v346, %v347
        %893 = vadd.xlane.f32.xlu0 %v892
        %v894 = vpop.xlane.xlu0 %893
        %v895 = vadd.f32 %v348, %v349
        %896 = vadd.xlane.f32.xlu0 %v895
        %v897 = vpop.xlane.xlu0 %896
        %v898 = vadd.f32 %v350, %v351
        %899 = vadd.xlane.f32.xlu0 %v898
        %v900 = vpop.xlane.xlu0 %899
        %v901 = vadd.f32 %v352, %v353
        %902 = vadd.xlane.f32.xlu0 %v901
        %v903 = vpop.xlane.xlu0 %902
        %v904 = vadd.f32 %v354, %v355
        %905 = vadd.xlane.f32.xlu0 %v904
        %v906 = vpop.xlane.xlu0 %905
        %v907 = vadd.f32 %v356, %v357
        %908 = vadd.xlane.f32.xlu0 %v907
        %v909 = vpop.xlane.xlu0 %908
        %v910 = vadd.f32 %v358, %v359
        %911 = vadd.xlane.f32.xlu0 %v910
        %v912 = vpop.xlane.xlu0 %911
        %v913 = vadd.f32 %v360, %v361
        %914 = vadd.xlane.f32.xlu0 %v913
        %v915 = vpop.xlane.xlu0 %914
        %v916 = vadd.f32 %v822, %v825
        %v917 = vadd.f32 %v916, %v828
        %v918 = vadd.f32 %v917, %v831
        %v919 = vadd.f32 %v918, %v834
        %v920 = vadd.f32 %v919, %v837
        %v921 = vadd.f32 %v920, %v840
        %v922 = vadd.f32 %v921, %v843
        %v923 = vadd.f32 %v922, %v846
        %v924 = vadd.f32 %v923, %v849
        %v925 = vadd.f32 %v924, %v852
        %v926 = vadd.f32 %v925, %v855
        %v927 = vadd.f32 %v926, %v858
        %v928 = vadd.f32 %v927, %v861
        %v929 = vadd.f32 %v928, %v864
        %v930 = vadd.f32 %v929, %v867
        %v931 = vadd.f32 %v930, %v870
        %v932 = vadd.f32 %v931, %v873
        %v933 = vadd.f32 %v932, %v876
        %v934 = vadd.f32 %v933, %v879
        %v935 = vadd.f32 %v934, %v882
        %v936 = vadd.f32 %v935, %v885
        %v937 = vadd.f32 %v936, %v888
        %v938 = vadd.f32 %v937, %v891
        %v939 = vadd.f32 %v938, %v894
        %v940 = vadd.f32 %v939, %v897
        %v941 = vadd.f32 %v940, %v900
        %v942 = vadd.f32 %v941, %v903
        %v943 = vadd.f32 %v942, %v906
        %v944 = vadd.f32 %v943, %v909
        %v945 = vadd.f32 %v944, %v912
        %v946 = vadd.f32 %v945, %v915
        %v947 = vrot.slane %v946, 4
        %v948 = vadd.f32 %v946, %v947
        %v949 = vrot.slane %v948, 2
        %v950 = vadd.f32 %v948, %v949
        %v951 = vrot.slane %v950, 1
        %v952 = vadd.f32 %v950, %v951
        %v953 = vadd.f32 %v819, %v952
        %v954 = vmul.f32 %v686, 2.0
        %v955 = vadd.f32 %v954, 1e-10
        %v956 = vadd.f32 %v953, 1e-10
        %v957 = vrcp.pop %v956
        %v958 = vmul.f32 %v955, %v957
        %s959 = smul.u32 %s23, 2
        %s960 = sadd.s32 %s959, %s24
        %p961 = scmp.lt.s32.totalorder %s960, 0
        %s962 = ssub.s32 0, %s960
        %s963 = scalar_select %p961, %s962, %s960
        %s964 = sand.u32 %s963, 1
        %s965 = ssub.s32 0, %s964
        %s966 = scalar_select %p961, %s965, %s964
        %p967 = scmp.ne.s32.totalorder %s966, 0
        %p968 = scmp.lt.s32.totalorder %s966, 0
        %p969 = pnand %p968, %p967
        %p970 = pneg %p969
        %s971 = sadd.s32 %s966, 2
        %s972 = scalar_select %p970, %s971, %s966
        %p973 = scmp.eq.s32.totalorder %s972, 0
        %s974 = scalar_select %p973, 1.0, 0.0
        %p975 = scmp.eq.s32.totalorder %s972, 1
        %s976 = scalar_select %p975, 2.0, %s974
        %s977 = smul.f32 %s976, 0.16666667
        %v978 = vstv %s977
        %v979 = vmul.f32 %v958, %v978
        %v980 = vld [vmem:[%s227] sm:$0x1]
        %v981 = vadd.f32 %v980, %v979
        %vm982 = vcmask 0
        %983 = vst.msk [vmem:[%s227] sm:$0x1] %vm982, %v981
        %p984 = scmp.lt.s32.totalorder %s23, 1
        %s985 = scalar_select %p984, %s23, 1
        %s986 = scalar_lea.vmem %s2, %s985
        // Predicated region
        $region41: #{dice_loss.1} parent=27 // pred_check
          %p987 = pneg %p109
        $region42: #{dice_loss.1} parent=27 // pred_check_branch
          %989 = sbr.rel (%p987) target = $region44
        $region43: #{dice_loss.1} parent=27 // pred_region
          _
        $region44: #{dice_loss.1} parent=27 // pred_fallthru
          _
      $region28: #{dice_loss.1} parent=5 // pred_fallthru
        _
      %p990 = scmp.le.s32.totalorder 2, %s14
      // Predicated region
      $region45: #{dice_loss.1} parent=5 // pred_check
        %p991 = pneg %p990
      $region46: #{dice_loss.1} parent=5 // pred_check_branch
        %993 = sbr.rel (%p991) target = $region48
      $region47: #{dice_loss.1} parent=5 // pred_region
        %s994 = ssub.s32 %s14, 2
        // Predicated region
        $region49: #{dice_loss.1} parent=47 // pred_check
          %p995 = pneg %p115
        $region50: #{dice_loss.1} parent=47 // pred_check_branch
          %997 = sbr.rel (%p995) target = $region52
        $region51: #{dice_loss.1} parent=47 // pred_region
          %p998 = scmp.lt.s32.totalorder %s25, 1
          %s999 = scalar_select %p998, %s25, 1
          %s1000 = scalar_lea.vmem %s2, %s999
        $region52: #{dice_loss.1} parent=47 // pred_fallthru
          _
      $region48: #{dice_loss.1} parent=5 // pred_fallthru
        _
    $region6: #{dice_loss.1} parent=1 // loop_footer
      %s18 = sadd.s32 1, %s14
    $region7: #{dice_loss.1} parent=1 // loop_footer_branch
      %13 = sbr.rel target = $region3
    $region8: #{dice_loss.1} parent=1 // loop_exit
      _
    %1001 = vsyncpa [#allocation3], 1
    %s1002 = scalar_lea.sflag [#allocation3], 1
    %1003 = vsyncpa %s1002, 1
    %1004 = vsyncpa [#allocation5], 1
    %s1005 = scalar_lea.sflag [#allocation5], 1
    %1006 = vsyncpa %s1005, 1

</llo_original>
